<compile_context>
chip_gen: v5e
topology: v5e:2x2
jax: 0.10.0
libtpu: 0.0.40
codegen_flags: <defaults>
</compile_context>

<pallas_src>
import jax
import jax.numpy as jnp
from jax import lax
from jax.experimental import pallas as pl
from jax.experimental.pallas import tpu as pltpu

# ---- config (QuantumSSLConfig defaults) -------------------------------------
MASK_NOISE_SCALE = 0.1
TEMPERATURE = 0.07
PROJECTION_DIM = 128   # config.projection_dim
NUM_QUBITS = 8         # pqc.config.num_qubits (small, synthetic)
BATCH = 8


def qcl_kernel(x_ref, noise_ref, w1_ref, b1_ref, w2_ref, b2_ref,
               z1_ref, z2_ref, loss_ref):
    x = x_ref[...]
    noise = noise_ref[...]
    B = x.shape[0]

    # --- _augment_state: add scaled gaussian noise, L2-normalize last dim ----
    # (matches torch: augmented / torch.norm(augmented, dim=-1, keepdim=True),
    #  no eps clamp in the reference)
    aug = x + noise * MASK_NOISE_SCALE
    aug = aug * lax.rsqrt(jnp.sum(aug * aug, axis=-1, keepdims=True))

    w1 = w1_ref[...]
    b1 = b1_ref[...]
    w2 = w2_ref[...]
    b2 = b2_ref[...]

    # --- projector: one stacked pass over [clean; augmented] -----------------
    stacked = jnp.concatenate([x, aug], axis=0)                     # [2B, Q]
    h = jnp.dot(stacked, w1, preferred_element_type=jnp.float32) + b1
    h = jnp.maximum(h, 0.0)
    z = jnp.dot(h, w2, preferred_element_type=jnp.float32) + b2     # [2B, P]

    z1 = z[:B, :]
    z2 = z[B:, :]
    z1_ref[...] = z1
    z2_ref[...] = z2

    # --- contrastive_loss (InfoNCE with labels = arange(B)) ------------------
    # F.normalize(z, dim=1): z / max(||z||, eps)  ==  z * min(rsqrt(||z||^2), 1/eps)
    eps = 1e-12
    inv1 = jnp.minimum(lax.rsqrt(jnp.sum(z1 * z1, axis=1, keepdims=True)), 1.0 / eps)
    inv2 = jnp.minimum(lax.rsqrt(jnp.sum(z2 * z2, axis=1, keepdims=True)), 1.0 / eps)
    z1n = z1 * inv1
    z2n = z2 * inv2

    # sim = z1n @ z2n.T without materializing the transpose (NT dot_general)
    sim = lax.dot_general(z1n, z2n, (((1,), (1,)), ((), ())),
                          preferred_element_type=jnp.float32) / TEMPERATURE

    # cross_entropy(sim, arange(B)) = mean_i [ logsumexp(sim_i) - sim[i, i] ]
    m = jnp.max(sim, axis=-1, keepdims=True)
    lse = jnp.log(jnp.sum(jnp.exp(sim - m), axis=-1, keepdims=True)) + m
    # diagonal of sim == rowwise dot(z1n, z2n) / T -- no iota/mask needed
    diag = jnp.sum(z1n * z2n, axis=-1, keepdims=True) / TEMPERATURE
    loss_ref[0, 0] = jnp.mean(lse - diag)


def quantum_contrastive_forward(x, noise, params):
    """Mirrors QuantumContrastiveLearner.forward -> (z1, z2, metrics)."""
    B, _ = x.shape
    P = params["w1"].shape[1]

    vmem = pl.BlockSpec(memory_space=pltpu.MemorySpace.VMEM)
    smem = pl.BlockSpec(memory_space=pltpu.MemorySpace.SMEM)

    z1, z2, loss = pl.pallas_call(
        qcl_kernel,
        out_shape=(
            jax.ShapeDtypeStruct((B, P), jnp.float32),
            jax.ShapeDtypeStruct((B, P), jnp.float32),
            jax.ShapeDtypeStruct((1, 1), jnp.float32),
        ),
        in_specs=[vmem, vmem, vmem, vmem, vmem, vmem],
        out_specs=(vmem, vmem, smem),
    )(x, noise, params["w1"], params["b1"], params["w2"], params["b2"])

    # Keep the loss as a device array (no per-call host sync). Call
    # float(metrics["contrastive_loss"][0, 0]) only when actually logging.
    metrics = {"contrastive_loss": loss, "z1": z1, "z2": z2}
    return z1, z2, metrics


def init_params(key, num_qubits=NUM_QUBITS, proj_dim=PROJECTION_DIM):
    """Deterministic init, PyTorch-Linear-style uniform(-1/sqrt(fan_in), +)."""
    k1, k2, k3, k4 = jax.random.split(key, 4)
    bound1 = 1.0 / jnp.sqrt(num_qubits)
    bound2 = 1.0 / jnp.sqrt(proj_dim)
    return {
        "w1": jax.random.uniform(k1, (num_qubits, proj_dim), jnp.float32,
                                 -bound1, bound1),
        "b1": jax.random.uniform(k2, (1, proj_dim), jnp.float32, -bound1, bound1),
        "w2": jax.random.uniform(k3, (proj_dim, proj_dim), jnp.float32,
                                 -bound2, bound2),
        "b2": jax.random.uniform(k4, (1, proj_dim), jnp.float32, -bound2, bound2),
    }


if __name__ == "__main__":
    key = jax.random.PRNGKey(0)
    kx, kn, kp = jax.random.split(key, 3)

    # x: batch of "quantum states" with num_qubits features
    x = jax.random.normal(kx, (BATCH, NUM_QUBITS), jnp.float32)
    # randn_like noise for _augment_state (scaled inside the kernel)
    noise = jax.random.normal(kn, (BATCH, NUM_QUBITS), jnp.float32)
    params = init_params(kp)

    z1, z2, metrics = quantum_contrastive_forward(x, noise, params)
    jax.block_until_ready((z1, z2, metrics["contrastive_loss"]))

    assert z1.shape == (BATCH, PROJECTION_DIM)
    assert z2.shape == (BATCH, PROJECTION_DIM)
    assert bool(jnp.isfinite(metrics["contrastive_loss"][0, 0]))
    print("KERNEL_OK")
</pallas_src>

<mosaic_0001>
module attributes {stable_mosaic.version = 11 : i64} {
  func.func @qcl_kernel(%arg0: memref<8x8xf32, #tpu.memory_space<vmem>>, %arg1: memref<8x8xf32, #tpu.memory_space<vmem>>, %arg2: memref<8x128xf32, #tpu.memory_space<vmem>>, %arg3: memref<1x128xf32, #tpu.memory_space<vmem>>, %arg4: memref<128x128xf32, #tpu.memory_space<vmem>>, %arg5: memref<1x128xf32, #tpu.memory_space<vmem>>, %arg6: memref<8x128xf32, #tpu.memory_space<vmem>>, %arg7: memref<8x128xf32, #tpu.memory_space<vmem>>, %arg8: memref<1x1xf32, #tpu.memory_space<smem>>) attributes {dimension_semantics = [], scalar_prefetch = 0 : i64, scratch_operands = 0 : i64, tpu.core_type = #tpu.core_type<tc>} {
    %c0 = arith.constant 0 : index
    %c0_0 = arith.constant 0 : index
    %0 = vector.load %arg0[%c0, %c0_0] : memref<8x8xf32, #tpu.memory_space<vmem>>, vector<8x8xf32>
    %c0_1 = arith.constant 0 : index
    %c0_2 = arith.constant 0 : index
    %1 = vector.load %arg1[%c0_1, %c0_2] : memref<8x8xf32, #tpu.memory_space<vmem>>, vector<8x8xf32>
    %cst = arith.constant 1.000000e-01 : f32
    %2 = vector.broadcast %cst : f32 to vector<8x8xf32>
    %3 = arith.mulf %1, %2 : vector<8x8xf32>
    %4 = arith.addf %0, %3 : vector<8x8xf32>
    %5 = arith.mulf %4, %4 : vector<8x8xf32>
    %cst_3 = arith.constant dense<0.000000e+00> : vector<8xf32>
    %6 = vector.multi_reduction <add>, %5, %cst_3 [1] : vector<8x8xf32> to vector<8xf32>
    %7 = vector.shape_cast %6 : vector<8xf32> to vector<8x1xf32>
    %8 = math.rsqrt %7 : vector<8x1xf32>
    %9 = vector.broadcast %8 : vector<8x1xf32> to vector<8x8xf32>
    %10 = arith.mulf %4, %9 : vector<8x8xf32>
    %c0_4 = arith.constant 0 : index
    %c0_5 = arith.constant 0 : index
    %11 = vector.load %arg2[%c0_4, %c0_5] : memref<8x128xf32, #tpu.memory_space<vmem>>, vector<8x128xf32>
    %c0_6 = arith.constant 0 : index
    %c0_7 = arith.constant 0 : index
    %12 = vector.load %arg3[%c0_6, %c0_7] : memref<1x128xf32, #tpu.memory_space<vmem>>, vector<1x128xf32>
    %c0_8 = arith.constant 0 : index
    %c0_9 = arith.constant 0 : index
    %13 = vector.load %arg4[%c0_8, %c0_9] : memref<128x128xf32, #tpu.memory_space<vmem>>, vector<128x128xf32>
    %c0_10 = arith.constant 0 : index
    %c0_11 = arith.constant 0 : index
    %14 = vector.load %arg5[%c0_10, %c0_11] : memref<1x128xf32, #tpu.memory_space<vmem>>, vector<1x128xf32>
    %15 = tpu.concatenate %0, %10 in 0 : vector<8x8xf32>, vector<8x8xf32> -> vector<16x8xf32>
    %cst_12 = arith.constant dense<0.000000e+00> : vector<16x128xf32>
    %16 = tpu.matmul %15, %11, %cst_12 {dimension_numbers = #tpu.dot_dimension_numbers<[1], [0], [0], [1], [0, 0, 1, 1], [], []>} : vector<16x8xf32>, vector<8x128xf32>, vector<16x128xf32> -> vector<16x128xf32>
    %17 = vector.broadcast %12 : vector<1x128xf32> to vector<16x128xf32>
    %18 = arith.addf %16, %17 : vector<16x128xf32>
    %cst_13 = arith.constant 0.000000e+00 : f32
    %19 = vector.broadcast %cst_13 : f32 to vector<16x128xf32>
    %20 = arith.maximumf %18, %19 : vector<16x128xf32>
    %cst_14 = arith.constant dense<0.000000e+00> : vector<16x128xf32>
    %21 = tpu.matmul %20, %13, %cst_14 {dimension_numbers = #tpu.dot_dimension_numbers<[1], [0], [0], [1], [0, 0, 1, 1], [], []>} : vector<16x128xf32>, vector<128x128xf32>, vector<16x128xf32> -> vector<16x128xf32>
    %22 = vector.broadcast %14 : vector<1x128xf32> to vector<16x128xf32>
    %23 = arith.addf %21, %22 : vector<16x128xf32>
    %24 = vector.extract_strided_slice %23 {offsets = [0, 0], sizes = [8, 128], strides = [1, 1]} : vector<16x128xf32> to vector<8x128xf32>
    %25 = vector.extract_strided_slice %23 {offsets = [8, 0], sizes = [8, 128], strides = [1, 1]} : vector<16x128xf32> to vector<8x128xf32>
    %c0_15 = arith.constant 0 : index
    %c0_16 = arith.constant 0 : index
    %26 = vector.load %arg6[%c0_15, %c0_16] : memref<8x128xf32, #tpu.memory_space<vmem>>, vector<8x128xf32>
    tpu.vector_store %arg6[%c0_15, %c0_16], %24 {strides = array<i32>} : memref<8x128xf32, #tpu.memory_space<vmem>>, vector<8x128xf32>,
    %c0_17 = arith.constant 0 : index
    %c0_18 = arith.constant 0 : index
    %27 = vector.load %arg7[%c0_17, %c0_18] : memref<8x128xf32, #tpu.memory_space<vmem>>, vector<8x128xf32>
    tpu.vector_store %arg7[%c0_17, %c0_18], %25 {strides = array<i32>} : memref<8x128xf32, #tpu.memory_space<vmem>>, vector<8x128xf32>,
    %28 = arith.mulf %24, %24 : vector<8x128xf32>
    %cst_19 = arith.constant dense<0.000000e+00> : vector<8xf32>
    %29 = vector.multi_reduction <add>, %28, %cst_19 [1] : vector<8x128xf32> to vector<8xf32>
    %30 = vector.shape_cast %29 : vector<8xf32> to vector<8x1xf32>
    %31 = math.rsqrt %30 : vector<8x1xf32>
    %cst_20 = arith.constant 9.99999995E+11 : f32
    %32 = vector.broadcast %cst_20 : f32 to vector<8x1xf32>
    %33 = arith.minimumf %31, %32 : vector<8x1xf32>
    %34 = arith.mulf %25, %25 : vector<8x128xf32>
    %cst_21 = arith.constant dense<0.000000e+00> : vector<8xf32>
    %35 = vector.multi_reduction <add>, %34, %cst_21 [1] : vector<8x128xf32> to vector<8xf32>
    %36 = vector.shape_cast %35 : vector<8xf32> to vector<8x1xf32>
    %37 = math.rsqrt %36 : vector<8x1xf32>
    %cst_22 = arith.constant 9.99999995E+11 : f32
    %38 = vector.broadcast %cst_22 : f32 to vector<8x1xf32>
    %39 = arith.minimumf %37, %38 : vector<8x1xf32>
    %40 = vector.broadcast %33 : vector<8x1xf32> to vector<8x128xf32>
    %41 = arith.mulf %24, %40 : vector<8x128xf32>
    %42 = vector.broadcast %39 : vector<8x1xf32> to vector<8x128xf32>
    %43 = arith.mulf %25, %42 : vector<8x128xf32>
    %cst_23 = arith.constant dense<0.000000e+00> : vector<8x8xf32>
    %44 = tpu.matmul %41, %43, %cst_23 {dimension_numbers = #tpu.dot_dimension_numbers<[1], [1], [0], [0], [0, 0, 1, 0], [], []>} : vector<8x128xf32>, vector<8x128xf32>, vector<8x8xf32> -> vector<8x8xf32>
    %cst_24 = arith.constant 7.000000e-02 : f32
    %45 = vector.broadcast %cst_24 : f32 to vector<8x8xf32>
    %46 = arith.divf %44, %45 : vector<8x8xf32>
    %cst_25 = arith.constant dense<0xFF800000> : vector<8xf32>
    %47 = vector.multi_reduction <maximumf>, %46, %cst_25 [1] : vector<8x8xf32> to vector<8xf32>
    %48 = vector.shape_cast %47 : vector<8xf32> to vector<8x1xf32>
    %49 = vector.broadcast %48 : vector<8x1xf32> to vector<8x8xf32>
    %50 = arith.subf %46, %49 : vector<8x8xf32>
    %51 = math.exp %50 : vector<8x8xf32>
    %cst_26 = arith.constant dense<0.000000e+00> : vector<8xf32>
    %52 = vector.multi_reduction <add>, %51, %cst_26 [1] : vector<8x8xf32> to vector<8xf32>
    %53 = vector.shape_cast %52 : vector<8xf32> to vector<8x1xf32>
    %54 = math.log %53 : vector<8x1xf32>
    %55 = arith.addf %54, %48 : vector<8x1xf32>
    %56 = arith.mulf %41, %43 : vector<8x128xf32>
    %cst_27 = arith.constant dense<0.000000e+00> : vector<8xf32>
    %57 = vector.multi_reduction <add>, %56, %cst_27 [1] : vector<8x128xf32> to vector<8xf32>
    %58 = vector.shape_cast %57 : vector<8xf32> to vector<8x1xf32>
    %cst_28 = arith.constant 7.000000e-02 : f32
    %59 = vector.broadcast %cst_28 : f32 to vector<8x1xf32>
    %60 = arith.divf %58, %59 : vector<8x1xf32>
    %61 = arith.subf %55, %60 : vector<8x1xf32>
    %62 = vector.shape_cast %61 : vector<8x1xf32> to vector<1x8x1xf32>
    %cst_29 = arith.constant dense<0.000000e+00> : vector<1xf32>
    %63 = vector.multi_reduction <add>, %62, %cst_29 [1, 2] : vector<1x8x1xf32> to vector<1xf32>
    %64 = vector.shape_cast %63 : vector<1xf32> to vector<1x1x1xf32>
    %65 = vector.extract %64[0, 0, 0] : f32 from vector<1x1x1xf32>
    %cst_30 = arith.constant 8.000000e+00 : f32
    %66 = arith.divf %65, %cst_30 : f32
    %c0_31 = arith.constant 0 : index
    %c0_32 = arith.constant 0 : index
    %67 = memref.load %arg8[%c0_31, %c0_32] : memref<1x1xf32, #tpu.memory_space<smem>>
    memref.store %66, %arg8[%c0_31, %c0_32] : memref<1x1xf32, #tpu.memory_space<smem>>
    return
  }
}

</mosaic_0001>

<llo_original>
// kernel: tpu_custom_call.1
$region0: #{tpu_custom_call.1}
  #allocation0 [shape = 'u32[]', space=smem, size = 0x4, offset = 0x4, fixed_abs, tag = 'smem constant byte address 0x4 - core index']
  #allocation1 [shape = 'u32[72,128]{1,0:T(1,128)}', space=vmem, size = 0x9000, scoped, tag = 'internal scratch']
  %s0 = inlined_call_operand.hbm [shape: f32[8,8], index: 0, kind: input, shape index: {}]
  %s1 = inlined_call_operand.hbm [shape: f32[8,8], index: 1, kind: input, shape index: {}]
  %s2 = inlined_call_operand.hbm [shape: f32[8,128], index: 2, kind: input, shape index: {}]
  %s3 = inlined_call_operand.vmem [shape: f32[1,128], index: 3, kind: input, shape index: {}]
  %s4 = inlined_call_operand.hbm [shape: f32[128,128], index: 4, kind: input, shape index: {}]
  %s5 = inlined_call_operand.vmem [shape: f32[1,128], index: 5, kind: input, shape index: {}]
  %s6 = inlined_call_operand.hbm [shape: f32[8,128], index: 6, kind: output, shape index: {0}]
  %s7 = inlined_call_operand.hbm [shape: f32[8,128], index: 7, kind: output, shape index: {1}]
  %s8 = inlined_call_operand.hbm [shape: f32[1,1], index: 8, kind: output, shape index: {2}]
  %9 = xla_tuple %s6, %s7, %s8
  %s10 = sld [smem:[#allocation0]]
  $region66: #{tpu_custom_call.1} parent=0
    _
  %s12 = ssub.s32 1, %s10
  %s13 = scalar_select 0, %s12, %s10
  $region1: #{tpu_custom_call.1} parent=0
    #allocation2 [shape = 'u8[4096]{0}', space=vmem, size = 0x1000, scoped, tag = 'input window, operand 0, single buffered']
    #allocation3 [shape = 's32[1]{0}', space=sflag, size = 0x4, scoped, tag = 'scoped memory for tpu_custom_call.1']
    #allocation4 [shape = 's32[1]{0}', space=sflag, size = 0x4, scoped, tag = 'scoped memory for tpu_custom_call.1']
    #allocation5 [shape = 's32[1]{0}', space=sflag, size = 0x4, scoped, tag = 'scoped memory for tpu_custom_call.1']
    #allocation6 [shape = 'u8[4096]{0}', space=vmem, size = 0x1000, scoped, tag = 'input window, operand 1, single buffered']
    #allocation7 [shape = 's32[1]{0}', space=sflag, size = 0x4, scoped, tag = 'scoped memory for tpu_custom_call.1']
    #allocation8 [shape = 'u8[4096]{0}', space=vmem, size = 0x1000, scoped, tag = 'input window, operand 2, single buffered']
    #allocation9 [shape = 'u8[65536]{0}', space=vmem, size = 0x10000, scoped, tag = 'input window, operand 4, single buffered']
    #allocation10 [shape = 's32[1]{0}', space=sflag, size = 0x4, scoped, tag = 'scoped memory for tpu_custom_call.1']
    #allocation11 [shape = 'u8[4096]{0}', space=vmem, size = 0x1000, scoped, tag = 'output window, operand 0, single buffered']
    #allocation12 [shape = 'u8[4096]{0}', space=vmem, size = 0x1000, scoped, tag = 'output window, operand 1, single buffered']
    #allocation13 [shape = 's32[1]{0}', space=sflag, size = 0x4, scoped, tag = 'scoped memory for tpu_custom_call.1']
    #allocation14 [shape = 'u8[512]{0}', space=smem, size = 0x200, scoped, tag = 'output window, operand 2, single buffered']
    %14 = vsyncpa [#allocation3], 0
    %15 = vsyncpa [#allocation7], 0
    %16 = vsyncpa [#allocation10], 0
    %17 = vsyncpa [#allocation4], 0
    %18 = vsyncpa [#allocation13], 0
    %19 = vsyncpa [#allocation5], 0
    // Predicated region
    $region2: #{tpu_custom_call.1} parent=1 // pred_check
      _
    $region3: #{tpu_custom_call.1} parent=1 // pred_check_branch
      %21 = sbr.rel (0) target = $region5
    $region4: #{tpu_custom_call.1} parent=1 // pred_region
      %23 = vsyncadd [#allocation3], 0
      %s25 = sshll.u32 %s0, 4
      %s26 = int_to_ptr.hbm [resolvable:$true] %s25
      %s27 = sshll.u32 [#allocation2], 4
      %s28 = int_to_ptr.vmem [resolvable:$true] %s27
      %30 = dma.hbm_to_vmem [thread:$0]  %s26, 128, %s28, [#allocation3]
    $region5: #{tpu_custom_call.1} parent=1 // pred_fallthru
      _
    // Predicated region
    $region6: #{tpu_custom_call.1} parent=1 // pred_check
      _
    $region7: #{tpu_custom_call.1} parent=1 // pred_check_branch
      %32 = sbr.rel (0) target = $region9
    $region8: #{tpu_custom_call.1} parent=1 // pred_region
      %34 = vsyncadd [#allocation7], 0
      %s36 = sshll.u32 %s1, 4
      %s37 = int_to_ptr.hbm [resolvable:$true] %s36
      %s38 = sshll.u32 [#allocation6], 4
      %s39 = int_to_ptr.vmem [resolvable:$true] %s38
      %41 = dma.hbm_to_vmem [thread:$0]  %s37, 128, %s39, [#allocation7]
    $region9: #{tpu_custom_call.1} parent=1 // pred_fallthru
      _
    // Predicated region
    $region10: #{tpu_custom_call.1} parent=1 // pred_check
      _
    $region11: #{tpu_custom_call.1} parent=1 // pred_check_branch
      %43 = sbr.rel (0) target = $region13
    $region12: #{tpu_custom_call.1} parent=1 // pred_region
      %45 = vsyncadd [#allocation7], 0
      %s47 = sshll.u32 %s2, 4
      %s48 = int_to_ptr.hbm [resolvable:$true] %s47
      %s49 = sshll.u32 [#allocation8], 4
      %s50 = int_to_ptr.vmem [resolvable:$true] %s49
      %52 = dma.hbm_to_vmem [thread:$0]  %s48, 128, %s50, [#allocation7]
    $region13: #{tpu_custom_call.1} parent=1 // pred_fallthru
      _
    // Predicated region
    $region14: #{tpu_custom_call.1} parent=1 // pred_check
      _
    $region15: #{tpu_custom_call.1} parent=1 // pred_check_branch
      %54 = sbr.rel (0) target = $region17
    $region16: #{tpu_custom_call.1} parent=1 // pred_region
      _
    $region17: #{tpu_custom_call.1} parent=1 // pred_fallthru
      _
    // Predicated region
    $region18: #{tpu_custom_call.1} parent=1 // pred_check
      _
    $region19: #{tpu_custom_call.1} parent=1 // pred_check_branch
      %56 = sbr.rel (0) target = $region21
    $region20: #{tpu_custom_call.1} parent=1 // pred_region
      %58 = vsyncadd [#allocation10], 0
      %s59 = sshll.u32 %s4, 4
      %s60 = int_to_ptr.hbm [resolvable:$true] %s59
      %s61 = sshll.u32 [#allocation9], 4
      %s62 = int_to_ptr.vmem [resolvable:$true] %s61
      %67 = dma.hbm_to_vmem [thread:$0]  %s60, 2048, %s62, [#allocation10], 128, 128, 8
    $region21: #{tpu_custom_call.1} parent=1 // pred_fallthru
      _
    // Predicated region
    $region22: #{tpu_custom_call.1} parent=1 // pred_check
      _
    $region23: #{tpu_custom_call.1} parent=1 // pred_check_branch
      %69 = sbr.rel (0) target = $region25
    $region24: #{tpu_custom_call.1} parent=1 // pred_region
      _
    $region25: #{tpu_custom_call.1} parent=1 // pred_fallthru
      _
    // Predicated region
    $region26: #{tpu_custom_call.1} parent=1 // pred_check
      _
    $region27: #{tpu_custom_call.1} parent=1 // pred_check_branch
      %71 = sbr.rel (0) target = $region29
    $region28: #{tpu_custom_call.1} parent=1 // pred_region
      %73 = dma.done [#allocation3], 128
    $region29: #{tpu_custom_call.1} parent=1 // pred_fallthru
      _
    // Predicated region
    $region30: #{tpu_custom_call.1} parent=1 // pred_check
      _
    $region31: #{tpu_custom_call.1} parent=1 // pred_check_branch
      %75 = sbr.rel (0) target = $region33
    $region32: #{tpu_custom_call.1} parent=1 // pred_region
      %77 = dma.done [#allocation7], 128
    $region33: #{tpu_custom_call.1} parent=1 // pred_fallthru
      _
    // Predicated region
    $region34: #{tpu_custom_call.1} parent=1 // pred_check
      _
    $region35: #{tpu_custom_call.1} parent=1 // pred_check_branch
      %79 = sbr.rel (0) target = $region37
    $region36: #{tpu_custom_call.1} parent=1 // pred_region
      %81 = dma.done [#allocation7], 128
    $region37: #{tpu_custom_call.1} parent=1 // pred_fallthru
      _
    // Predicated region
    $region38: #{tpu_custom_call.1} parent=1 // pred_check
      _
    $region39: #{tpu_custom_call.1} parent=1 // pred_check_branch
      %83 = sbr.rel (0) target = $region41
    $region40: #{tpu_custom_call.1} parent=1 // pred_region
      %85 = dma.done [#allocation10], 2048
    $region41: #{tpu_custom_call.1} parent=1 // pred_fallthru
      _
    %v86 = vld [vmem:[#allocation2] sm:$0xff]
    %v87 = vld [vmem:[#allocation6] sm:$0xff]
    %v88 = vmul.f32 %v87, 0.1
    %v89 = vadd.f32 %v86, %v88
    %v90 = vmul.f32 %v89, %v89
    %vm91 = vcmask 64512
    %v92 = vsel %vm91, %v90, 0.0
    %93 = vadd.xlane.f32.xlu0 %v92
    %v94 = vpop.xlane.xlu0 %93
    %v95 = vrsqrt.pop %v94
    %v96 = vmul.f32 %v95, %v94
    %v97 = vmul.f32 %v96, %v95
    %v98 = vmul.f32 0.5, %v97
    %v99 = vsub.f32 1.5, %v98
    %v100 = vmul.f32 %v95, %v99
    %vm101 = vweird.f32 %v94
    %vm102 = vweird.f32 %v95
    %vm103 = vmor %vm101, %vm102
    %v104 = vsel %vm103, %v95, %v100
    %v105 = vmul.f32 %v89, %v104
    %v106 = vld [vmem:[#allocation8] sm:$0xff]
    %v107 = vld [vmem:[%s3] sm:$0x1]
    %v108 = vld [vmem:[#allocation9] sm:$0xff]
    %v109 = vld [vmem:[#allocation9 + $0x8] sm:$0xff]
    %v110 = vld [vmem:[#allocation9 + $0x10] sm:$0xff]
    %v111 = vld [vmem:[#allocation9 + $0x18] sm:$0xff]
    %v112 = vld [vmem:[#allocation9 + $0x20] sm:$0xff]
    %v113 = vld [vmem:[#allocation9 + $0x28] sm:$0xff]
    %v114 = vld [vmem:[#allocation9 + $0x30] sm:$0xff]
    %v115 = vld [vmem:[#allocation9 + $0x38] sm:$0xff]
    %v116 = vld [vmem:[#allocation9 + $0x40] sm:$0xff]
    %v117 = vld [vmem:[#allocation9 + $0x48] sm:$0xff]
    %v118 = vld [vmem:[#allocation9 + $0x50] sm:$0xff]
    %v119 = vld [vmem:[#allocation9 + $0x58] sm:$0xff]
    %v120 = vld [vmem:[#allocation9 + $0x60] sm:$0xff]
    %v121 = vld [vmem:[#allocation9 + $0x68] sm:$0xff]
    %v122 = vld [vmem:[#allocation9 + $0x70] sm:$0xff]
    %v123 = vld [vmem:[#allocation9 + $0x78] sm:$0xff]
    %v124 = vld [vmem:[%s5] sm:$0x1]
    %v126 = vperm.slane %v107, 0
    %v129 = vsel %vm91, %v86, 0
    %v132 = vsel %vm91, %v105, 0
    %134 = vmatpush.msra.mxu0 0.0
    %135 = vmatpush.msra.mxu0 0.0
    %136 = vmatpush.msra.mxu0 0.0
    %137 = vmatpush.msra.mxu0 0.0
    %138 = vmatpush.msra.mxu0 0.0
    %139 = vmatpush.msra.mxu0 0.0
    %140 = vmatpush.msra.mxu0 0.0
    %141 = vmatpush.msra.mxu0 0.0
    %142 = vmatpush.msra.mxu0 0.0
    %143 = vmatpush.msra.mxu0 0.0
    %144 = vmatpush.msra.mxu0 0.0
    %145 = vmatpush.msra.mxu0 0.0
    %146 = vmatpush.msra.mxu0 0.0
    %147 = vmatpush.msra.mxu0 0.0
    %148 = vmatpush.msra.mxu0 0.0
    %149 = vmatpush.msra.mxu0 %v106
    %150 = vmatmul.f32.gmra.mxu0 %v129
    %v151 = vpop.f32.mrf.mxu0
    %v152 = vadd.f32 %v126, %v151
    %153 = vmatmul.f32.gmra.mxu0 %v132
    %v154 = vpop.f32.mrf.mxu0
    %v155 = vadd.f32 %v126, %v154
    %156 = vdwg.mxu0
    %v157 = vmax.f32 %v152, 0.0
    %v158 = vmax.f32 %v155, 0.0
    %v160 = vperm.slane %v124, 0
    %162 = vmatpush.msra.mxu0 %v123
    %163 = vmatpush.msra.mxu0 %v122
    %164 = vmatpush.msra.mxu0 %v121
    %165 = vmatpush.msra.mxu0 %v120
    %166 = vmatpush.msra.mxu0 %v119
    %167 = vmatpush.msra.mxu0 %v118
    %168 = vmatpush.msra.mxu0 %v117
    %169 = vmatpush.msra.mxu0 %v116
    %170 = vmatpush.msra.mxu0 %v115
    %171 = vmatpush.msra.mxu0 %v114
    %172 = vmatpush.msra.mxu0 %v113
    %173 = vmatpush.msra.mxu0 %v112
    %174 = vmatpush.msra.mxu0 %v111
    %175 = vmatpush.msra.mxu0 %v110
    %176 = vmatpush.msra.mxu0 %v109
    %177 = vmatpush.msra.mxu0 %v108
    %178 = vmatmul.f32.gmra.mxu0 %v157
    %v179 = vpop.f32.mrf.mxu0
    %v180 = vadd.f32 %v160, %v179
    %181 = vmatmul.f32.gmra.mxu0 %v158
    %v182 = vpop.f32.mrf.mxu0
    %v183 = vadd.f32 %v160, %v182
    %184 = vdwg.mxu0
    %185 = vst [vmem:[#allocation11] sm:$0xff] %v180
    %186 = vst [vmem:[#allocation12] sm:$0xff] %v183
    %v187 = vmul.f32 %v180, %v180
    %188 = vadd.xlane.f32.xlu0 %v187
    %v189 = vpop.xlane.xlu0 %188
    %v190 = vrsqrt.pop %v189
    %v191 = vmul.f32 %v190, %v189
    %v192 = vmul.f32 %v191, %v190
    %v193 = vmul.f32 0.5, %v192
    %v194 = vsub.f32 1.5, %v193
    %v195 = vmul.f32 %v190, %v194
    %vm196 = vweird.f32 %v189
    %vm197 = vweird.f32 %v190
    %vm198 = vmor %vm196, %vm197
    %v199 = vsel %vm198, %v190, %v195
    %v200 = vmin.f32 %v199, 1e+12
    %v201 = vmul.f32 %v183, %v183
    %202 = vadd.xlane.f32.xlu0 %v201
    %v203 = vpop.xlane.xlu0 %202
    %v204 = vrsqrt.pop %v203
    %v205 = vmul.f32 %v204, %v203
    %v206 = vmul.f32 %v205, %v204
    %v207 = vmul.f32 0.5, %v206
    %v208 = vsub.f32 1.5, %v207
    %v209 = vmul.f32 %v204, %v208
    %vm210 = vweird.f32 %v203
    %vm211 = vweird.f32 %v204
    %vm212 = vmor %vm210, %vm211
    %v213 = vsel %vm212, %v204, %v209
    %v214 = vmin.f32 %v213, 1e+12
    %v215 = vmul.f32 %v180, %v200
    %v216 = vmul.f32 %v183, %v214
    %217 = vmatpush.xpose.msra.mxu0 0.0
    %218 = vmatpush.xpose.msra.mxu0 0.0
    %219 = vmatpush.xpose.msra.mxu0 0.0
    %220 = vmatpush.xpose.msra.mxu0 0.0
    %221 = vmatpush.xpose.msra.mxu0 0.0
    %222 = vmatpush.xpose.msra.mxu0 0.0
    %223 = vmatpush.xpose.msra.mxu0 0.0
    %224 = vmatpush.xpose.msra.mxu0 0.0
    %225 = vmatpush.xpose.msra.mxu0 0.0
    %226 = vmatpush.xpose.msra.mxu0 0.0
    %227 = vmatpush.xpose.msra.mxu0 0.0
    %228 = vmatpush.xpose.msra.mxu0 0.0
    %229 = vmatpush.xpose.msra.mxu0 0.0
    %230 = vmatpush.xpose.msra.mxu0 0.0
    %231 = vmatpush.xpose.msra.mxu0 0.0
    %232 = vmatpush.xpose.msra.mxu0 %v216
    %233 = vmatmul.f32.gmra.mxu0 %v215
    %v234 = vpop.f32.mrf.mxu0
    %v235 = vadd.f32 0.0, %v234
    %236 = vdwg.mxu0
    %v237 = vrcp.pop 0.07
    %v238 = vmul.f32 0.07, %v237
    %v239 = vsub.f32 1.0, %v238
    %v240 = vmul.f32 %v237, %v239
    %v241 = vadd.f32 %v237, %v240
    %vm242 = vweird.f32 %v237
    %v243 = vsel %vm242, %v237, %v241
    %v244 = vmul.f32 %v235, %v243
    %v245 = vsel %vm91, %v244, -inf
    %246 = vmax.xlane.f32.xlu0 %v245
    %v247 = vpop.xlane.xlu0 %246
    %v248 = vsub.f32 %v244, %v247
    %v249 = vmul.f32 %v248, 1.442695
    %v250 = vpow.pop %v249
    %v251 = vsel %vm91, %v250, 0.0
    %252 = vadd.xlane.f32.xlu0 %v251
    %v253 = vpop.xlane.xlu0 %252
    %v254 = vlog2.pop %v253
    %v255 = vmul.f32 %v254, 0.6931472
    %v256 = vadd.f32 %v255, %v247
    %v257 = vmul.f32 %v215, %v216
    %258 = vadd.xlane.f32.xlu0 %v257
    %v259 = vpop.xlane.xlu0 %258
    %v260 = vmul.f32 %v259, %v243
    %v261 = vsub.f32 %v256, %v260
    %vm262 = vcmask 7168
    %v263 = vsel %vm262, %v261, 0.0
    %264 = vadd.xlane.f32.xlu0 %v263
    %v265 = vpop.xlane.xlu0 %264
    %v266 = vrot.slane %v265, 4
    %v267 = vadd.f32 %v265, %v266
    %v268 = vrot.slane %v267, 2
    %v269 = vadd.f32 %v267, %v268
    %v270 = vrot.slane %v269, 1
    %v271 = vadd.f32 %v269, %v270
    %s272 = vtos %v271
    %v273 = vrcp.pop 8.0
    %v274 = vmul.f32 8.0, %v273
    %v275 = vsub.f32 1.0, %v274
    %v276 = vmul.f32 %v273, %v275
    %v277 = vadd.f32 %v273, %v276
    %vm278 = vweird.f32 %v273
    %v279 = vsel %vm278, %v273, %v277
    %s280 = vtos %v279
    %s281 = smul.f32 %s272, %s280
    %s282 = scalar_lea.smem [#allocation14], 0
    %283 = sst [smem:[%s282]] %s281
    // Predicated region
    $region42: #{tpu_custom_call.1} parent=1 // pred_check
      _
    $region43: #{tpu_custom_call.1} parent=1 // pred_check_branch
      %285 = sbr.rel (0) target = $region45
    $region44: #{tpu_custom_call.1} parent=1 // pred_region
      %287 = vsyncadd [#allocation4], 0
      %s289 = sshll.u32 [#allocation11], 4
      %s290 = int_to_ptr.vmem [resolvable:$true] %s289
      %s291 = sshll.u32 %s6, 4
      %s292 = int_to_ptr.hbm [resolvable:$true] %s291
      %294 = dma.vmem_to_hbm [thread:$0]  %s290, 128, %s292, [#allocation4]
    $region45: #{tpu_custom_call.1} parent=1 // pred_fallthru
      _
    // Predicated region
    $region46: #{tpu_custom_call.1} parent=1 // pred_check
      _
    $region47: #{tpu_custom_call.1} parent=1 // pred_check_branch
      %296 = sbr.rel (0) target = $region49
    $region48: #{tpu_custom_call.1} parent=1 // pred_region
      %298 = vsyncadd [#allocation13], 0
      %s300 = sshll.u32 [#allocation12], 4
      %s301 = int_to_ptr.vmem [resolvable:$true] %s300
      %s302 = sshll.u32 %s7, 4
      %s303 = int_to_ptr.hbm [resolvable:$true] %s302
      %305 = dma.vmem_to_hbm [thread:$0]  %s301, 128, %s303, [#allocation13]
    $region49: #{tpu_custom_call.1} parent=1 // pred_fallthru
      _
    // Predicated region
    $region50: #{tpu_custom_call.1} parent=1 // pred_check
      _
    $region51: #{tpu_custom_call.1} parent=1 // pred_check_branch
      %307 = sbr.rel (0) target = $region53
    $region52: #{tpu_custom_call.1} parent=1 // pred_region
      %309 = vsyncadd [#allocation5], 0
      %s311 = sshll.u32 %s8, 4
      %s312 = int_to_ptr.hbm [resolvable:$true] %s311
      %314 = dma.smem_to_hbm [#allocation14], 16, %s312, [#allocation5]
    $region53: #{tpu_custom_call.1} parent=1 // pred_fallthru
      _
    // Predicated region
    $region54: #{tpu_custom_call.1} parent=1 // pred_check
      _
    $region55: #{tpu_custom_call.1} parent=1 // pred_check_branch
      %316 = sbr.rel (0) target = $region57
    $region56: #{tpu_custom_call.1} parent=1 // pred_region
      %318 = dma.done [#allocation4], 128
    $region57: #{tpu_custom_call.1} parent=1 // pred_fallthru
      _
    // Predicated region
    $region58: #{tpu_custom_call.1} parent=1 // pred_check
      _
    $region59: #{tpu_custom_call.1} parent=1 // pred_check_branch
      %320 = sbr.rel (0) target = $region61
    $region60: #{tpu_custom_call.1} parent=1 // pred_region
      %322 = dma.done [#allocation13], 128
    $region61: #{tpu_custom_call.1} parent=1 // pred_fallthru
      _
    // Predicated region
    $region62: #{tpu_custom_call.1} parent=1 // pred_check
      _
    $region63: #{tpu_custom_call.1} parent=1 // pred_check_branch
      %324 = sbr.rel (0) target = $region65
    $region64: #{tpu_custom_call.1} parent=1 // pred_region
      %326 = dma.done [#allocation5], 16
    $region65: #{tpu_custom_call.1} parent=1 // pred_fallthru
      _
    %327 = sfence
    %328 = vsyncpa [#allocation3], 1
    %329 = vsyncpa [#allocation7], 1
    %330 = vsyncpa [#allocation10], 1
    %331 = vsyncpa [#allocation4], 1
    %332 = vsyncpa [#allocation13], 1
    %333 = vsyncpa [#allocation5], 1

</llo_original>
